<compile_context>
chip_gen: v6e
topology: v6e:2x2x1
jax: 0.10.0
libtpu: 0.0.40
codegen_flags: <defaults>
</compile_context>

<pallas_src>
import jax
import jax.numpy as jnp
from jax.experimental import pallas as pl
from jax.experimental.pallas import tpu as pltpu

_LANES = 128
_SUBLANES = 8


def _round_up(n, m):
    return ((n + m - 1) // m) * m


def mlp_kernel(x_ref, w1_ref, b1_ref, w2_ref, b2_ref, o_ref):
    # x_ref:  (2, TILE_B)   features-major batch tile (batch on the lane axis)
    # w1_ref: (H_pad, 2)    PyTorch linear1.weight layout, hidden padded to 8
    # b1_ref: (H_pad, 1)    linear1.bias (column)
    # w2_ref: (H_pad, 1)    linear2.weight transposed (column)
    # b2_ref: (1, 1)        linear2.bias scalar in SMEM
    # o_ref:  (1, TILE_B)
    x0 = x_ref[0:1, :]
    x1 = x_ref[1:2, :]
    tile_b = x_ref.shape[1]
    h_pad = w1_ref.shape[0]
    n_groups = h_pad // _SUBLANES

    # Hidden layer in 8-sublane groups: acc += relu(w1_g0*x0 + w1_g1*x1 + b1_g) * w2_g.
    # The (H, TILE_B) hidden tensor never materializes; all work is VPU
    # broadcast multiply-adds (layer1 K=2 and layer2 N=1 can never fill the MXU).
    acc = jnp.zeros((_SUBLANES, tile_b), jnp.float32)
    for g in range(n_groups):
        lo = g * _SUBLANES
        hi = lo + _SUBLANES
        w1g = w1_ref[lo:hi, :]                                   # (8, 2)
        b1g = b1_ref[lo:hi, :]                                   # (8, 1)
        w2g = w2_ref[lo:hi, :]                                   # (8, 1)
        h = w1g[:, 0:1] * x0 + w1g[:, 1:2] * x1 + b1g            # (8, TILE_B)
        h = jnp.maximum(h, 0.0)                                  # ReLU
        acc = acc + h * w2g                                      # fold linear2 weight

    y = jnp.sum(acc, axis=0, keepdims=True) + b2_ref[0, 0]       # (1, TILE_B) sublane reduce (XLU)
    # Exact sigmoid (exp on the EUP; exact divide keeps parity with torch.sigmoid).
    o_ref[...] = 1.0 / (1.0 + jnp.exp(-y))


def nn_forward(x, w1, b1, w2, b2, *, tile_b=32768):
    """x: (B, 2); w1: (50, 2); b1: (50,); w2: (1, 50); b2: (1,). Returns (B, 1)."""
    B, in_f = x.shape
    H = w1.shape[0]
    assert in_f == 2 and w1.shape == (H, 2)
    assert b1.shape == (H,) and w2.shape == (1, H) and b2.shape == (1,)

    # Batch tile: as large as useful, capped at the (lane-rounded) batch, and
    # split into >=2 grid steps when the batch allows it (v7x has 2 TensorCores).
    b_ceil = _round_up(max(B, 1), _LANES)
    tile = min(_round_up(max(tile_b, _LANES), _LANES), b_ceil)
    if b_ceil > 2 * _LANES and tile >= b_ceil:
        tile = _round_up(-(-b_ceil // 2), _LANES)
    num_tiles = -(-B // tile)
    b_pad = num_tiles * tile

    h_pad = _round_up(H, _SUBLANES)

    # Layout plumbing: features-major (batch on lanes), zero-pad batch and hidden.
    # Padded hidden rows have w2 == 0 so they contribute nothing; padded batch
    # columns are computed and discarded by the final slice.
    x_t = jnp.pad(x.T, ((0, 0), (0, b_pad - B)))                 # (2, B_pad)
    w1_p = jnp.pad(w1, ((0, h_pad - H), (0, 0)))                 # (H_pad, 2)
    b1_p = jnp.pad(b1, (0, h_pad - H)).reshape(h_pad, 1)         # (H_pad, 1)
    w2_p = jnp.pad(w2[0], (0, h_pad - H)).reshape(h_pad, 1)      # (H_pad, 1)
    b2_s = b2.reshape(1, 1)                                      # (1, 1) -> SMEM

    out_t = pl.pallas_call(
        mlp_kernel,
        out_shape=jax.ShapeDtypeStruct((1, b_pad), jnp.float32),
        grid=(num_tiles,),
        in_specs=[
            pl.BlockSpec((2, tile), lambda i: (0, i)),            # x tile (streamed)
            pl.BlockSpec((h_pad, 2), lambda i: (0, 0)),           # w1 (VMEM-resident)
            pl.BlockSpec((h_pad, 1), lambda i: (0, 0)),           # b1 (resident)
            pl.BlockSpec((h_pad, 1), lambda i: (0, 0)),           # w2 (resident)
            pl.BlockSpec(memory_space=pltpu.MemorySpace.SMEM),    # b2 scalar
        ],
        out_specs=pl.BlockSpec((1, tile), lambda i: (0, i)),
        compiler_params=pltpu.CompilerParams(
            dimension_semantics=("parallel",),
            vmem_limit_bytes=32 * 1024 * 1024,
        ),
    )(x_t, w1_p, b1_p, w2_p, b2_s)

    return out_t[0, :B].reshape(B, 1)


def init_params(key):
    # Deterministic init mimicking nn.Linear's U(-1/sqrt(fan_in), 1/sqrt(fan_in)),
    # stored in PyTorch layout: w1 (50, 2), b1 (50,), w2 (1, 50), b2 (1,).
    k1, k2, k3, k4 = jax.random.split(key, 4)
    bound1 = 1.0 / jnp.sqrt(2.0)
    bound2 = 1.0 / jnp.sqrt(50.0)
    w1 = jax.random.uniform(k1, (50, 2), jnp.float32, -bound1, bound1)
    b1 = jax.random.uniform(k2, (50,), jnp.float32, -bound1, bound1)
    w2 = jax.random.uniform(k3, (1, 50), jnp.float32, -bound2, bound2)
    b2 = jax.random.uniform(k4, (1,), jnp.float32, -bound2, bound2)
    return w1, b1, w2, b2


if __name__ == "__main__":
    key = jax.random.PRNGKey(0)
    kx, kp = jax.random.split(key)

    # Small demo shape; B not a multiple of 128 to exercise the padding path.
    B = 300
    x = jax.random.normal(kx, (B, 2), jnp.float32)
    w1, b1, w2, b2 = init_params(kp)

    # Reference in plain JAX (PyTorch semantics: x @ W.T + b).
    ref = jax.nn.sigmoid(jnp.maximum(x @ w1.T + b1, 0.0) @ w2.T + b2)

    # Default tiling (auto-capped tile, 2 grid steps for B=300).
    out = jax.block_until_ready(nn_forward(x, w1, b1, w2, b2))
    assert out.shape == (B, 1)
    assert jnp.allclose(out, ref, atol=1e-4), "mismatch vs reference (default tile)"

    # Small-tile path: multiple grid steps plus a ragged final tile.
    out_small = jax.block_until_ready(nn_forward(x, w1, b1, w2, b2, tile_b=128))
    assert jnp.allclose(out_small, ref, atol=1e-4), "mismatch vs reference (tile_b=128)"

    print("KERNEL_OK")
</pallas_src>

<mosaic_0001>
module attributes {stable_mosaic.version = 11 : i64} {
  func.func @mlp_kernel(%arg0: i32, %arg1: memref<2x256xf32, #tpu.memory_space<vmem>>, %arg2: memref<56x2xf32, #tpu.memory_space<vmem>>, %arg3: memref<56x1xf32, #tpu.memory_space<vmem>>, %arg4: memref<56x1xf32, #tpu.memory_space<vmem>>, %arg5: memref<1x1xf32, #tpu.memory_space<smem>>, %arg6: memref<1x256xf32, #tpu.memory_space<vmem>>) attributes {dimension_semantics = [#tpu.dimension_semantics<parallel>], iteration_bounds = array<i64: 2>, scalar_prefetch = 0 : i64, scratch_operands = 0 : i64, tpu.core_type = #tpu.core_type<tc>, window_params = [{transform_indices = @transform_0, window_bounds = array<i64: 2, 256>}, {pipeline_mode = #tpu.pipeline_mode<synchronous>, transform_indices = @transform_1, window_bounds = array<i64: 56, 2>}, {pipeline_mode = #tpu.pipeline_mode<synchronous>, transform_indices = @transform_2, window_bounds = array<i64: 56, 1>}, {pipeline_mode = #tpu.pipeline_mode<synchronous>, transform_indices = @transform_3, window_bounds = array<i64: 56, 1>}, {transform_indices = @transform_4, window_bounds = array<i64: 1, 1>}, {transform_indices = @transform_5, window_bounds = array<i64: 1, 256>}]} {
    %c0 = arith.constant 0 : index
    %c0_0 = arith.constant 0 : index
    %0 = vector.load %arg1[%c0, %c0_0] : memref<2x256xf32, #tpu.memory_space<vmem>>, vector<1x256xf32>
    %c1 = arith.constant 1 : index
    %c0_1 = arith.constant 0 : index
    %1 = vector.load %arg1[%c1, %c0_1] : memref<2x256xf32, #tpu.memory_space<vmem>>, vector<1x256xf32>
    %cst = arith.constant 0.000000e+00 : f32
    %2 = vector.broadcast %cst : f32 to vector<8x256xf32>
    %c0_2 = arith.constant 0 : index
    %c0_3 = arith.constant 0 : index
    %3 = vector.load %arg2[%c0_2, %c0_3] : memref<56x2xf32, #tpu.memory_space<vmem>>, vector<8x2xf32>
    %c0_4 = arith.constant 0 : index
    %c0_5 = arith.constant 0 : index
    %4 = vector.load %arg3[%c0_4, %c0_5] : memref<56x1xf32, #tpu.memory_space<vmem>>, vector<8x1xf32>
    %c0_6 = arith.constant 0 : index
    %c0_7 = arith.constant 0 : index
    %5 = vector.load %arg4[%c0_6, %c0_7] : memref<56x1xf32, #tpu.memory_space<vmem>>, vector<8x1xf32>
    %6 = vector.extract_strided_slice %3 {offsets = [0, 0], sizes = [8, 1], strides = [1, 1]} : vector<8x2xf32> to vector<8x1xf32>
    %7 = vector.broadcast %6 : vector<8x1xf32> to vector<8x256xf32>
    %8 = vector.broadcast %0 : vector<1x256xf32> to vector<8x256xf32>
    %9 = arith.mulf %7, %8 : vector<8x256xf32>
    %10 = vector.extract_strided_slice %3 {offsets = [0, 1], sizes = [8, 1], strides = [1, 1]} : vector<8x2xf32> to vector<8x1xf32>
    %11 = vector.broadcast %10 : vector<8x1xf32> to vector<8x256xf32>
    %12 = vector.broadcast %1 : vector<1x256xf32> to vector<8x256xf32>
    %13 = arith.mulf %11, %12 : vector<8x256xf32>
    %14 = arith.addf %9, %13 : vector<8x256xf32>
    %15 = vector.broadcast %4 : vector<8x1xf32> to vector<8x256xf32>
    %16 = arith.addf %14, %15 : vector<8x256xf32>
    %cst_8 = arith.constant 0.000000e+00 : f32
    %17 = vector.broadcast %cst_8 : f32 to vector<8x256xf32>
    %18 = arith.maximumf %16, %17 : vector<8x256xf32>
    %19 = vector.broadcast %5 : vector<8x1xf32> to vector<8x256xf32>
    %20 = arith.mulf %18, %19 : vector<8x256xf32>
    %21 = arith.addf %2, %20 : vector<8x256xf32>
    %c8 = arith.constant 8 : index
    %c0_9 = arith.constant 0 : index
    %22 = vector.load %arg2[%c8, %c0_9] : memref<56x2xf32, #tpu.memory_space<vmem>>, vector<8x2xf32>
    %c8_10 = arith.constant 8 : index
    %c0_11 = arith.constant 0 : index
    %23 = vector.load %arg3[%c8_10, %c0_11] : memref<56x1xf32, #tpu.memory_space<vmem>>, vector<8x1xf32>
    %c8_12 = arith.constant 8 : index
    %c0_13 = arith.constant 0 : index
    %24 = vector.load %arg4[%c8_12, %c0_13] : memref<56x1xf32, #tpu.memory_space<vmem>>, vector<8x1xf32>
    %25 = vector.extract_strided_slice %22 {offsets = [0, 0], sizes = [8, 1], strides = [1, 1]} : vector<8x2xf32> to vector<8x1xf32>
    %26 = vector.broadcast %25 : vector<8x1xf32> to vector<8x256xf32>
    %27 = vector.broadcast %0 : vector<1x256xf32> to vector<8x256xf32>
    %28 = arith.mulf %26, %27 : vector<8x256xf32>
    %29 = vector.extract_strided_slice %22 {offsets = [0, 1], sizes = [8, 1], strides = [1, 1]} : vector<8x2xf32> to vector<8x1xf32>
    %30 = vector.broadcast %29 : vector<8x1xf32> to vector<8x256xf32>
    %31 = vector.broadcast %1 : vector<1x256xf32> to vector<8x256xf32>
    %32 = arith.mulf %30, %31 : vector<8x256xf32>
    %33 = arith.addf %28, %32 : vector<8x256xf32>
    %34 = vector.broadcast %23 : vector<8x1xf32> to vector<8x256xf32>
    %35 = arith.addf %33, %34 : vector<8x256xf32>
    %cst_14 = arith.constant 0.000000e+00 : f32
    %36 = vector.broadcast %cst_14 : f32 to vector<8x256xf32>
    %37 = arith.maximumf %35, %36 : vector<8x256xf32>
    %38 = vector.broadcast %24 : vector<8x1xf32> to vector<8x256xf32>
    %39 = arith.mulf %37, %38 : vector<8x256xf32>
    %40 = arith.addf %21, %39 : vector<8x256xf32>
    %c16 = arith.constant 16 : index
    %c0_15 = arith.constant 0 : index
    %41 = vector.load %arg2[%c16, %c0_15] : memref<56x2xf32, #tpu.memory_space<vmem>>, vector<8x2xf32>
    %c16_16 = arith.constant 16 : index
    %c0_17 = arith.constant 0 : index
    %42 = vector.load %arg3[%c16_16, %c0_17] : memref<56x1xf32, #tpu.memory_space<vmem>>, vector<8x1xf32>
    %c16_18 = arith.constant 16 : index
    %c0_19 = arith.constant 0 : index
    %43 = vector.load %arg4[%c16_18, %c0_19] : memref<56x1xf32, #tpu.memory_space<vmem>>, vector<8x1xf32>
    %44 = vector.extract_strided_slice %41 {offsets = [0, 0], sizes = [8, 1], strides = [1, 1]} : vector<8x2xf32> to vector<8x1xf32>
    %45 = vector.broadcast %44 : vector<8x1xf32> to vector<8x256xf32>
    %46 = vector.broadcast %0 : vector<1x256xf32> to vector<8x256xf32>
    %47 = arith.mulf %45, %46 : vector<8x256xf32>
    %48 = vector.extract_strided_slice %41 {offsets = [0, 1], sizes = [8, 1], strides = [1, 1]} : vector<8x2xf32> to vector<8x1xf32>
    %49 = vector.broadcast %48 : vector<8x1xf32> to vector<8x256xf32>
    %50 = vector.broadcast %1 : vector<1x256xf32> to vector<8x256xf32>
    %51 = arith.mulf %49, %50 : vector<8x256xf32>
    %52 = arith.addf %47, %51 : vector<8x256xf32>
    %53 = vector.broadcast %42 : vector<8x1xf32> to vector<8x256xf32>
    %54 = arith.addf %52, %53 : vector<8x256xf32>
    %cst_20 = arith.constant 0.000000e+00 : f32
    %55 = vector.broadcast %cst_20 : f32 to vector<8x256xf32>
    %56 = arith.maximumf %54, %55 : vector<8x256xf32>
    %57 = vector.broadcast %43 : vector<8x1xf32> to vector<8x256xf32>
    %58 = arith.mulf %56, %57 : vector<8x256xf32>
    %59 = arith.addf %40, %58 : vector<8x256xf32>
    %c24 = arith.constant 24 : index
    %c0_21 = arith.constant 0 : index
    %60 = vector.load %arg2[%c24, %c0_21] : memref<56x2xf32, #tpu.memory_space<vmem>>, vector<8x2xf32>
    %c24_22 = arith.constant 24 : index
    %c0_23 = arith.constant 0 : index
    %61 = vector.load %arg3[%c24_22, %c0_23] : memref<56x1xf32, #tpu.memory_space<vmem>>, vector<8x1xf32>
    %c24_24 = arith.constant 24 : index
    %c0_25 = arith.constant 0 : index
    %62 = vector.load %arg4[%c24_24, %c0_25] : memref<56x1xf32, #tpu.memory_space<vmem>>, vector<8x1xf32>
    %63 = vector.extract_strided_slice %60 {offsets = [0, 0], sizes = [8, 1], strides = [1, 1]} : vector<8x2xf32> to vector<8x1xf32>
    %64 = vector.broadcast %63 : vector<8x1xf32> to vector<8x256xf32>
    %65 = vector.broadcast %0 : vector<1x256xf32> to vector<8x256xf32>
    %66 = arith.mulf %64, %65 : vector<8x256xf32>
    %67 = vector.extract_strided_slice %60 {offsets = [0, 1], sizes = [8, 1], strides = [1, 1]} : vector<8x2xf32> to vector<8x1xf32>
    %68 = vector.broadcast %67 : vector<8x1xf32> to vector<8x256xf32>
    %69 = vector.broadcast %1 : vector<1x256xf32> to vector<8x256xf32>
    %70 = arith.mulf %68, %69 : vector<8x256xf32>
    %71 = arith.addf %66, %70 : vector<8x256xf32>
    %72 = vector.broadcast %61 : vector<8x1xf32> to vector<8x256xf32>
    %73 = arith.addf %71, %72 : vector<8x256xf32>
    %cst_26 = arith.constant 0.000000e+00 : f32
    %74 = vector.broadcast %cst_26 : f32 to vector<8x256xf32>
    %75 = arith.maximumf %73, %74 : vector<8x256xf32>
    %76 = vector.broadcast %62 : vector<8x1xf32> to vector<8x256xf32>
    %77 = arith.mulf %75, %76 : vector<8x256xf32>
    %78 = arith.addf %59, %77 : vector<8x256xf32>
    %c32 = arith.constant 32 : index
    %c0_27 = arith.constant 0 : index
    %79 = vector.load %arg2[%c32, %c0_27] : memref<56x2xf32, #tpu.memory_space<vmem>>, vector<8x2xf32>
    %c32_28 = arith.constant 32 : index
    %c0_29 = arith.constant 0 : index
    %80 = vector.load %arg3[%c32_28, %c0_29] : memref<56x1xf32, #tpu.memory_space<vmem>>, vector<8x1xf32>
    %c32_30 = arith.constant 32 : index
    %c0_31 = arith.constant 0 : index
    %81 = vector.load %arg4[%c32_30, %c0_31] : memref<56x1xf32, #tpu.memory_space<vmem>>, vector<8x1xf32>
    %82 = vector.extract_strided_slice %79 {offsets = [0, 0], sizes = [8, 1], strides = [1, 1]} : vector<8x2xf32> to vector<8x1xf32>
    %83 = vector.broadcast %82 : vector<8x1xf32> to vector<8x256xf32>
    %84 = vector.broadcast %0 : vector<1x256xf32> to vector<8x256xf32>
    %85 = arith.mulf %83, %84 : vector<8x256xf32>
    %86 = vector.extract_strided_slice %79 {offsets = [0, 1], sizes = [8, 1], strides = [1, 1]} : vector<8x2xf32> to vector<8x1xf32>
    %87 = vector.broadcast %86 : vector<8x1xf32> to vector<8x256xf32>
    %88 = vector.broadcast %1 : vector<1x256xf32> to vector<8x256xf32>
    %89 = arith.mulf %87, %88 : vector<8x256xf32>
    %90 = arith.addf %85, %89 : vector<8x256xf32>
    %91 = vector.broadcast %80 : vector<8x1xf32> to vector<8x256xf32>
    %92 = arith.addf %90, %91 : vector<8x256xf32>
    %cst_32 = arith.constant 0.000000e+00 : f32
    %93 = vector.broadcast %cst_32 : f32 to vector<8x256xf32>
    %94 = arith.maximumf %92, %93 : vector<8x256xf32>
    %95 = vector.broadcast %81 : vector<8x1xf32> to vector<8x256xf32>
    %96 = arith.mulf %94, %95 : vector<8x256xf32>
    %97 = arith.addf %78, %96 : vector<8x256xf32>
    %c40 = arith.constant 40 : index
    %c0_33 = arith.constant 0 : index
    %98 = vector.load %arg2[%c40, %c0_33] : memref<56x2xf32, #tpu.memory_space<vmem>>, vector<8x2xf32>
    %c40_34 = arith.constant 40 : index
    %c0_35 = arith.constant 0 : index
    %99 = vector.load %arg3[%c40_34, %c0_35] : memref<56x1xf32, #tpu.memory_space<vmem>>, vector<8x1xf32>
    %c40_36 = arith.constant 40 : index
    %c0_37 = arith.constant 0 : index
    %100 = vector.load %arg4[%c40_36, %c0_37] : memref<56x1xf32, #tpu.memory_space<vmem>>, vector<8x1xf32>
    %101 = vector.extract_strided_slice %98 {offsets = [0, 0], sizes = [8, 1], strides = [1, 1]} : vector<8x2xf32> to vector<8x1xf32>
    %102 = vector.broadcast %101 : vector<8x1xf32> to vector<8x256xf32>
    %103 = vector.broadcast %0 : vector<1x256xf32> to vector<8x256xf32>
    %104 = arith.mulf %102, %103 : vector<8x256xf32>
    %105 = vector.extract_strided_slice %98 {offsets = [0, 1], sizes = [8, 1], strides = [1, 1]} : vector<8x2xf32> to vector<8x1xf32>
    %106 = vector.broadcast %105 : vector<8x1xf32> to vector<8x256xf32>
    %107 = vector.broadcast %1 : vector<1x256xf32> to vector<8x256xf32>
    %108 = arith.mulf %106, %107 : vector<8x256xf32>
    %109 = arith.addf %104, %108 : vector<8x256xf32>
    %110 = vector.broadcast %99 : vector<8x1xf32> to vector<8x256xf32>
    %111 = arith.addf %109, %110 : vector<8x256xf32>
    %cst_38 = arith.constant 0.000000e+00 : f32
    %112 = vector.broadcast %cst_38 : f32 to vector<8x256xf32>
    %113 = arith.maximumf %111, %112 : vector<8x256xf32>
    %114 = vector.broadcast %100 : vector<8x1xf32> to vector<8x256xf32>
    %115 = arith.mulf %113, %114 : vector<8x256xf32>
    %116 = arith.addf %97, %115 : vector<8x256xf32>
    %c48 = arith.constant 48 : index
    %c0_39 = arith.constant 0 : index
    %117 = vector.load %arg2[%c48, %c0_39] : memref<56x2xf32, #tpu.memory_space<vmem>>, vector<8x2xf32>
    %c48_40 = arith.constant 48 : index
    %c0_41 = arith.constant 0 : index
    %118 = vector.load %arg3[%c48_40, %c0_41] : memref<56x1xf32, #tpu.memory_space<vmem>>, vector<8x1xf32>
    %c48_42 = arith.constant 48 : index
    %c0_43 = arith.constant 0 : index
    %119 = vector.load %arg4[%c48_42, %c0_43] : memref<56x1xf32, #tpu.memory_space<vmem>>, vector<8x1xf32>
    %120 = vector.extract_strided_slice %117 {offsets = [0, 0], sizes = [8, 1], strides = [1, 1]} : vector<8x2xf32> to vector<8x1xf32>
    %121 = vector.broadcast %120 : vector<8x1xf32> to vector<8x256xf32>
    %122 = vector.broadcast %0 : vector<1x256xf32> to vector<8x256xf32>
    %123 = arith.mulf %121, %122 : vector<8x256xf32>
    %124 = vector.extract_strided_slice %117 {offsets = [0, 1], sizes = [8, 1], strides = [1, 1]} : vector<8x2xf32> to vector<8x1xf32>
    %125 = vector.broadcast %124 : vector<8x1xf32> to vector<8x256xf32>
    %126 = vector.broadcast %1 : vector<1x256xf32> to vector<8x256xf32>
    %127 = arith.mulf %125, %126 : vector<8x256xf32>
    %128 = arith.addf %123, %127 : vector<8x256xf32>
    %129 = vector.broadcast %118 : vector<8x1xf32> to vector<8x256xf32>
    %130 = arith.addf %128, %129 : vector<8x256xf32>
    %cst_44 = arith.constant 0.000000e+00 : f32
    %131 = vector.broadcast %cst_44 : f32 to vector<8x256xf32>
    %132 = arith.maximumf %130, %131 : vector<8x256xf32>
    %133 = vector.broadcast %119 : vector<8x1xf32> to vector<8x256xf32>
    %134 = arith.mulf %132, %133 : vector<8x256xf32>
    %135 = arith.addf %116, %134 : vector<8x256xf32>
    %cst_45 = arith.constant dense<0.000000e+00> : vector<256xf32>
    %136 = vector.multi_reduction <add>, %135, %cst_45 [0] : vector<8x256xf32> to vector<256xf32>
    %137 = vector.shape_cast %136 : vector<256xf32> to vector<1x256xf32>
    %c0_46 = arith.constant 0 : index
    %c0_47 = arith.constant 0 : index
    %138 = memref.load %arg5[%c0_46, %c0_47] : memref<1x1xf32, #tpu.memory_space<smem>>
    %139 = vector.broadcast %138 : f32 to vector<1x256xf32>
    %140 = arith.addf %137, %139 : vector<1x256xf32>
    %cst_48 = arith.constant 0.000000e+00 : f32
    %141 = vector.broadcast %cst_48 : f32 to vector<1x256xf32>
    %142 = arith.subf %141, %140 : vector<1x256xf32>
    %143 = math.exp %142 : vector<1x256xf32>
    %cst_49 = arith.constant 1.000000e+00 : f32
    %144 = vector.broadcast %cst_49 : f32 to vector<1x256xf32>
    %145 = arith.addf %144, %143 : vector<1x256xf32>
    %cst_50 = arith.constant 1.000000e+00 : f32
    %146 = vector.broadcast %cst_50 : f32 to vector<1x256xf32>
    %147 = arith.divf %146, %145 : vector<1x256xf32>
    %c0_51 = arith.constant 0 : index
    %c0_52 = arith.constant 0 : index
    %148 = vector.load %arg6[%c0_51, %c0_52] : memref<1x256xf32, #tpu.memory_space<vmem>>, vector<1x256xf32>
    tpu.vector_store %arg6[%c0_51, %c0_52], %147 {strides = array<i32>} : memref<1x256xf32, #tpu.memory_space<vmem>>, vector<1x256xf32>,
    return
  }
  func.func @transform_0(%arg0: i32) -> (i32, i32) {
    %c0_i32 = arith.constant 0 : i32
    %c0_i32_0 = arith.constant 0 : i32
    return %c0_i32, %arg0 : i32, i32
  }
  func.func @transform_1(%arg0: i32) -> (i32, i32) {
    %c0_i32 = arith.constant 0 : i32
    %c0_i32_0 = arith.constant 0 : i32
    %c0_i32_1 = arith.constant 0 : i32
    return %c0_i32, %c0_i32_0 : i32, i32
  }
  func.func @transform_2(%arg0: i32) -> (i32, i32) {
    %c0_i32 = arith.constant 0 : i32
    %c0_i32_0 = arith.constant 0 : i32
    %c0_i32_1 = arith.constant 0 : i32
    return %c0_i32, %c0_i32_0 : i32, i32
  }
  func.func @transform_3(%arg0: i32) -> (i32, i32) {
    %c0_i32 = arith.constant 0 : i32
    %c0_i32_0 = arith.constant 0 : i32
    %c0_i32_1 = arith.constant 0 : i32
    return %c0_i32, %c0_i32_0 : i32, i32
  }
  func.func @transform_4(%arg0: i32) -> (i32, i32) {
    %c0_i32 = arith.constant 0 : i32
    %c0_i32_0 = arith.constant 0 : i32
    %c0_i32_1 = arith.constant 0 : i32
    return %c0_i32, %c0_i32_0 : i32, i32
  }
  func.func @transform_5(%arg0: i32) -> (i32, i32) {
    %c0_i32 = arith.constant 0 : i32
    %c0_i32_0 = arith.constant 0 : i32
    return %c0_i32, %arg0 : i32, i32
  }
}

</mosaic_0001>

<llo_original>
// kernel: tpu_custom_call.1
$region0: #{tpu_custom_call.1}
  #allocation0 [shape = 'u32[]', space=smem, size = 0x4, offset = 0x4, fixed_abs, tag = 'smem constant byte address 0x4 - core index']
  #allocation1 [shape = 'u32[144,128]{1,0:T(1,128)}', space=vmem, size = 0x12000, scoped, tag = 'internal scratch']
  #allocation2 [shape = 'f32[1,1]{1,0:T(1,128)S(6)}', space=smem, size = 0x200, scoped, tag = 'scoped memory for tpu_custom_call.1']
  %s0 = inlined_call_operand.vmem [shape: f32[2,512], index: 0, kind: input, shape index: {}]
  %s1 = inlined_call_operand.vmem [shape: f32[56,2], index: 1, kind: input, shape index: {}]
  %s2 = inlined_call_operand.vmem [shape: f32[56,1], index: 2, kind: input, shape index: {}]
  %s3 = inlined_call_operand.vmem [shape: f32[56,1], index: 3, kind: input, shape index: {}]
  %s4 = inlined_call_operand.<no memory space> [shape: f32[1,1], index: 4, kind: input, shape index: {}]
  %s5 = inlined_call_operand.hbm [shape: f32[1,512], index: 5, kind: output, shape index: {}]
  %s6 = sld [smem:[#allocation0]]
  $region53: #{tpu_custom_call.1} parent=0
    _
  %s8 = ssub.s32 1, %s6
  %s9 = scalar_select 0, %s8, %s6
  %10 = sst [smem:[#allocation2]] %s4
  $region1: #{tpu_custom_call.1} parent=0
    #allocation3 [shape = 'u8[2048]{0}', space=vmem, size = 0x800, scoped, tag = 'output window, operand 0']
    #allocation4 [shape = 's32[2]{0}', space=sflag, size = 0x8, scoped, tag = 'scoped memory for tpu_custom_call.1']
    %11 = vsyncpa [#allocation4], 0
    %s12 = scalar_lea.sflag [#allocation4], 1
    %13 = vsyncpa %s12, 0
    loop: start=0, step=1, limit=4
    $region2: #{tpu_custom_call.1} parent=1 // loop_pre_header
      _
    $region3: #{tpu_custom_call.1} parent=1 // loop_header
      %s15 = sphi 0, %s19
      %p16 = scmp.ge.s32.totalorder %s15, 4
      %s25 = sphi 0, %s27
      %s28 = sphi 0, %s25
      %s29 = sphi 0, %s28
      %s45 = sphi 0, %s29
      %s49 = sphi 0, %s49
      %s51 = sphi 0, %s49
      %s52 = sphi 0, %s51
      %s66 = sphi 0, %s52
      %s70 = sphi 0, %s70
      %s72 = sphi 0, %s70
      %s73 = sphi 0, %s72
      %s87 = sphi 0, %s73
      %s91 = sphi 0, %s91
      %s93 = sphi 0, %s91
      %s94 = sphi 0, %s93
      %s108 = sphi 0, %s94
      %s112 = sphi 0, %s112
      %s114 = sphi 0, %s112
      %s115 = sphi 0, %s114
      %s129 = sphi 0, %s115
      %s135 = sphi 0, %s137
      %s138 = sphi 0, %s135
      %s139 = sphi 0, %s138
      %s155 = sphi 0, %s139
    $region4: #{tpu_custom_call.1} parent=1 // loop_header_branch
      %18 = sbr.rel (%p16) target = $region8
    $region5: #{tpu_custom_call.1} parent=1 // loop_body
      %s20 = ssub.s32 %s15, 1
      %s21 = ssub.s32 %s15, 2
      %s22 = sadd.s32 %s15, 1
      %s23 = ssub.s32 %s15, %s22
      %p24 = scmp.eq.s32.totalorder %s23, 0
      %s26 = sadd.s32 %s25, 1
      %s27 = scalar_select %p24, %s25, %s26
      %p30 = pneg %p24
      %p31 = scmp.eq.s32.totalorder %s15, 1
      %p32 = por %p30, %p31
      %p33 = scmp.ne.s32.totalorder %s25, %s28
      %p34 = scmp.eq.s32.totalorder %s15, 0
      %p35 = por %p33, %p34
      %p36 = scmp.ne.s32.totalorder %s25, %s28
      %p37 = scmp.eq.s32.totalorder %s20, 1
      %p38 = por %p36, %p37
      %p39 = scmp.ne.s32.totalorder %s28, %s29
      %p40 = scmp.eq.s32.totalorder %s20, 0
      %p41 = por %p39, %p40
      %p42 = scmp.ne.s32.totalorder %s28, %s29
      %p43 = scmp.eq.s32.totalorder %s21, 1
      %p44 = por %p42, %p43
      %p46 = scmp.ne.s32.totalorder %s29, %s45
      %p47 = scmp.eq.s32.totalorder %s21, 0
      %p48 = por %p46, %p47
      %s50 = sadd.s32 %s49, 1
      %p53 = scmp.eq.s32.totalorder %s15, 1
      %p54 = scmp.ne.s32.totalorder %s49, %s51
      %p55 = scmp.eq.s32.totalorder %s15, 0
      %p56 = por %p54, %p55
      %p57 = scmp.ne.s32.totalorder %s49, %s51
      %p58 = scmp.eq.s32.totalorder %s20, 1
      %p59 = por %p57, %p58
      %p60 = scmp.ne.s32.totalorder %s51, %s52
      %p61 = scmp.eq.s32.totalorder %s20, 0
      %p62 = por %p60, %p61
      %p63 = scmp.ne.s32.totalorder %s51, %s52
      %p64 = scmp.eq.s32.totalorder %s21, 1
      %p65 = por %p63, %p64
      %p67 = scmp.ne.s32.totalorder %s52, %s66
      %p68 = scmp.eq.s32.totalorder %s21, 0
      %p69 = por %p67, %p68
      %s71 = sadd.s32 %s70, 1
      %p74 = scmp.eq.s32.totalorder %s15, 1
      %p75 = scmp.ne.s32.totalorder %s70, %s72
      %p76 = scmp.eq.s32.totalorder %s15, 0
      %p77 = por %p75, %p76
      %p78 = scmp.ne.s32.totalorder %s70, %s72
      %p79 = scmp.eq.s32.totalorder %s20, 1
      %p80 = por %p78, %p79
      %p81 = scmp.ne.s32.totalorder %s72, %s73
      %p82 = scmp.eq.s32.totalorder %s20, 0
      %p83 = por %p81, %p82
      %p84 = scmp.ne.s32.totalorder %s72, %s73
      %p85 = scmp.eq.s32.totalorder %s21, 1
      %p86 = por %p84, %p85
      %p88 = scmp.ne.s32.totalorder %s73, %s87
      %p89 = scmp.eq.s32.totalorder %s21, 0
      %p90 = por %p88, %p89
      %s92 = sadd.s32 %s91, 1
      %p95 = scmp.eq.s32.totalorder %s15, 1
      %p96 = scmp.ne.s32.totalorder %s91, %s93
      %p97 = scmp.eq.s32.totalorder %s15, 0
      %p98 = por %p96, %p97
      %p99 = scmp.ne.s32.totalorder %s91, %s93
      %p100 = scmp.eq.s32.totalorder %s20, 1
      %p101 = por %p99, %p100
      %p102 = scmp.ne.s32.totalorder %s93, %s94
      %p103 = scmp.eq.s32.totalorder %s20, 0
      %p104 = por %p102, %p103
      %p105 = scmp.ne.s32.totalorder %s93, %s94
      %p106 = scmp.eq.s32.totalorder %s21, 1
      %p107 = por %p105, %p106
      %p109 = scmp.ne.s32.totalorder %s94, %s108
      %p110 = scmp.eq.s32.totalorder %s21, 0
      %p111 = por %p109, %p110
      %s113 = sadd.s32 %s112, 1
      %p116 = scmp.eq.s32.totalorder %s15, 1
      %p117 = scmp.ne.s32.totalorder %s112, %s114
      %p118 = scmp.eq.s32.totalorder %s15, 0
      %p119 = por %p117, %p118
      %p120 = scmp.ne.s32.totalorder %s112, %s114
      %p121 = scmp.eq.s32.totalorder %s20, 1
      %p122 = por %p120, %p121
      %p123 = scmp.ne.s32.totalorder %s114, %s115
      %p124 = scmp.eq.s32.totalorder %s20, 0
      %p125 = por %p123, %p124
      %p126 = scmp.ne.s32.totalorder %s114, %s115
      %p127 = scmp.eq.s32.totalorder %s21, 1
      %p128 = por %p126, %p127
      %p130 = scmp.ne.s32.totalorder %s115, %s129
      %p131 = scmp.eq.s32.totalorder %s21, 0
      %p132 = por %p130, %p131
      %s133 = ssub.s32 %s15, %s22
      %p134 = scmp.eq.s32.totalorder %s133, 0
      %s136 = sadd.s32 %s135, 1
      %s137 = scalar_select %p134, %s135, %s136
      %p140 = pneg %p134
      %p141 = scmp.eq.s32.totalorder %s15, 1
      %p142 = por %p140, %p141
      %p143 = scmp.ne.s32.totalorder %s135, %s138
      %p144 = scmp.eq.s32.totalorder %s15, 0
      %p145 = por %p143, %p144
      %p146 = scmp.ne.s32.totalorder %s135, %s138
      %p147 = scmp.eq.s32.totalorder %s20, 1
      %p148 = por %p146, %p147
      %p149 = scmp.ne.s32.totalorder %s138, %s139
      %p150 = scmp.eq.s32.totalorder %s20, 0
      %p151 = por %p149, %p150
      %p152 = scmp.ne.s32.totalorder %s138, %s139
      %p153 = scmp.eq.s32.totalorder %s21, 1
      %p154 = por %p152, %p153
      %p156 = scmp.ne.s32.totalorder %s139, %s155
      %p157 = scmp.eq.s32.totalorder %s21, 0
      %p158 = por %p156, %p157
      %p159 = scmp.le.s32.totalorder 1, %s15
      %p160 = scmp.lt.s32.totalorder %s15, 3
      %p161 = pnand %p159, %p160
      %p162 = pneg %p161
      // Predicated region
      $region9: #{tpu_custom_call.1} parent=5 // pred_check
        _
      $region10: #{tpu_custom_call.1} parent=5 // pred_check_branch
        %164 = sbr.rel (%p161) target = $region12
      $region11: #{tpu_custom_call.1} parent=5 // pred_region
        %s165 = ssub.s32 %s15, 1
        // Predicated region
        $region13: #{tpu_custom_call.1} parent=11 // pred_check
          %p166 = pneg %p62
        $region14: #{tpu_custom_call.1} parent=11 // pred_check_branch
          %168 = sbr.rel (%p166) target = $region16
        $region15: #{tpu_custom_call.1} parent=11 // pred_region
          _
        $region16: #{tpu_custom_call.1} parent=11 // pred_fallthru
          _
        // Predicated region
        $region17: #{tpu_custom_call.1} parent=11 // pred_check
          %p169 = pneg %p83
        $region18: #{tpu_custom_call.1} parent=11 // pred_check_branch
          %171 = sbr.rel (%p169) target = $region20
        $region19: #{tpu_custom_call.1} parent=11 // pred_region
          _
        $region20: #{tpu_custom_call.1} parent=11 // pred_fallthru
          _
        // Predicated region
        $region21: #{tpu_custom_call.1} parent=11 // pred_check
          %p172 = pneg %p104
        $region22: #{tpu_custom_call.1} parent=11 // pred_check_branch
          %174 = sbr.rel (%p172) target = $region24
        $region23: #{tpu_custom_call.1} parent=11 // pred_region
          _
        $region24: #{tpu_custom_call.1} parent=11 // pred_fallthru
          _
        // Predicated region
        $region25: #{tpu_custom_call.1} parent=11 // pred_check
          %p175 = pneg %p125
        $region26: #{tpu_custom_call.1} parent=11 // pred_check_branch
          %177 = sbr.rel (%p175) target = $region28
        $region27: #{tpu_custom_call.1} parent=11 // pred_region
          _
        $region28: #{tpu_custom_call.1} parent=11 // pred_fallthru
          _
      $region12: #{tpu_custom_call.1} parent=5 // pred_fallthru
        _
      %p178 = scmp.lt.s32.totalorder %s15, 2
      // Predicated region
      $region29: #{tpu_custom_call.1} parent=5 // pred_check
        %p179 = pneg %p178
      $region30: #{tpu_custom_call.1} parent=5 // pred_check_branch
        %181 = sbr.rel (%p179) target = $region32
      $region31: #{tpu_custom_call.1} parent=5 // pred_region
        // Predicated region
        $region33: #{tpu_custom_call.1} parent=31 // pred_check
          %p182 = pneg %p35
        $region34: #{tpu_custom_call.1} parent=31 // pred_check_branch
          %184 = sbr.rel (%p182) target = $region36
        $region35: #{tpu_custom_call.1} parent=31 // pred_region
          %s185 = smul.u32 2, %s15
          %p186 = scmp.lt.s32.totalorder %s185, 3
          %s187 = scalar_select %p186, %s185, 3
          %s188 = smul.addr %s187, 2
          %s189 = scalar_lea.vmem %s0, %s188
          %s190 = smul.u32 2, %s15
        $region36: #{tpu_custom_call.1} parent=31 // pred_fallthru
          _
      $region32: #{tpu_custom_call.1} parent=5 // pred_fallthru
        _
      %p191 = scmp.le.s32.totalorder 1, %s15
      %p192 = scmp.lt.s32.totalorder %s15, 3
      %p193 = pnand %p191, %p192
      %p194 = pneg %p193
      // Predicated region
      $region37: #{tpu_custom_call.1} parent=5 // pred_check
        _
      $region38: #{tpu_custom_call.1} parent=5 // pred_check_branch
        %196 = sbr.rel (%p193) target = $region40
      $region39: #{tpu_custom_call.1} parent=5 // pred_region
        %s197 = ssub.s32 %s15, 1
        %s198 = smul.u32 2, %s20
        %p199 = scmp.lt.s32.totalorder %s198, 3
        %s200 = scalar_select %p199, %s198, 3
        %s201 = smul.addr %s200, 2
        %s202 = scalar_lea.vmem %s0, %s201
        %p203 = pneg %p41
        %p204 = pneg %p38
        %p205 = pneg %p62
        %p206 = pneg %p59
        %p207 = pneg %p83
        %p208 = pneg %p80
        %p209 = pneg %p104
        %p210 = pneg %p101
        %p211 = pneg %p125
        %p212 = pneg %p122
        %p213 = pneg %p151
        %p214 = pneg %p148
        %s215 = sand.u32 %s138, 1
        %s216 = scalar_lea.sflag [#allocation4], %s215
        %s217 = sand.u32 %s138, 1
        %s218 = smul.addr %s217, 2
        %s219 = scalar_lea.vmem [#allocation3], %s218
        %s220 = smul.u32 2, %s20
        %p221 = scmp.lt.s32.totalorder %s220, 3
        %s222 = scalar_select %p221, %s220, 3
        %s223 = smul.addr %s222, 2
        %s224 = scalar_lea.vmem %s0, %s223
        %s225 = smul.u32 2, %s20
        %s226 = smul.u32 2, %s20
        %v227 = vld [vmem:[%s224] ss:$2 sm:$0x3]
        %s228 = scalar_lea.vmem %s224, 1
        %v229 = vld [vmem:[%s228] ss:$2 sm:$0x3]
        %v230 = vld [vmem:[%s1] sm:$0xff]
        %v231 = vld [vmem:[%s2] sm:$0xff]
        %v232 = vld [vmem:[%s3] sm:$0xff]
        %234 = vset.pattern.permute.xlu0 0
        %235 = vperm.xlu0 %234, %v230
        %v236 = vpop.permute.xlu0 %235
        %v239 = vlaneseq
        %v240 = vshrl.u32 %v239, 7
        %v241 = vsub.s32 0, %v240
        %v242 = vrot.slane %v227, %v241
        %v243 = vlaneseq
        %v244 = vshrl.u32 %v243, 7
        %v245 = vsub.s32 1, %v244
        %v246 = vrot.slane %v227, %v245
        %v249 = vmul.f32 %v236, %v242
        %v250 = vmul.f32 %v236, %v246
        %251 = vset.pattern.permute.xlu0 1
        %252 = vperm.xlu0 %251, %v230
        %v253 = vpop.permute.xlu0 %252
        %v256 = vlaneseq
        %v257 = vshrl.u32 %v256, 7
        %v258 = vsub.s32 0, %v257
        %v259 = vrot.slane %v229, %v258
        %v260 = vlaneseq
        %v261 = vshrl.u32 %v260, 7
        %v262 = vsub.s32 1, %v261
        %v263 = vrot.slane %v229, %v262
        %v266 = vmul.f32 %v253, %v259
        %v267 = vmul.f32 %v253, %v263
        %v268 = vadd.f32 %v249, %v266
        %v269 = vadd.f32 %v250, %v267
        %271 = vset.pattern.permute.xlu0 0
        %272 = vperm.xlu0 %271, %v231
        %v273 = vpop.permute.xlu0 %272
        %v275 = vadd.f32 %v268, %v273
        %v276 = vadd.f32 %v269, %v273
        %v277 = vmax.f32 %v275, 0.0
        %v278 = vmax.f32 %v276, 0.0
        %280 = vset.pattern.permute.xlu0 0
        %281 = vperm.xlu0 %280, %v232
        %v282 = vpop.permute.xlu0 %281
        %v284 = vmul.f32 %v277, %v282
        %v285 = vmul.f32 %v278, %v282
        %v286 = vadd.f32 %v284, 0.0
        %v287 = vadd.f32 %v285, 0.0
        %v288 = vld [vmem:[%s1 + $0x8] sm:$0xff]
        %v289 = vld [vmem:[%s2 + $0x8] sm:$0xff]
        %v290 = vld [vmem:[%s3 + $0x8] sm:$0xff]
        %292 = vset.pattern.permute.xlu0 0
        %293 = vperm.xlu0 %292, %v288
        %v294 = vpop.permute.xlu0 %293
        %v296 = vmul.f32 %v294, %v242
        %v297 = vmul.f32 %v294, %v246
        %298 = vset.pattern.permute.xlu0 1
        %299 = vperm.xlu0 %298, %v288
        %v300 = vpop.permute.xlu0 %299
        %v302 = vmul.f32 %v300, %v259
        %v303 = vmul.f32 %v300, %v263
        %v304 = vadd.f32 %v296, %v302
        %v305 = vadd.f32 %v297, %v303
        %307 = vset.pattern.permute.xlu0 0
        %308 = vperm.xlu0 %307, %v289
        %v309 = vpop.permute.xlu0 %308
        %v311 = vadd.f32 %v304, %v309
        %v312 = vadd.f32 %v305, %v309
        %v313 = vmax.f32 %v311, 0.0
        %v314 = vmax.f32 %v312, 0.0
        %316 = vset.pattern.permute.xlu0 0
        %317 = vperm.xlu0 %316, %v290
        %v318 = vpop.permute.xlu0 %317
        %v320 = vmul.f32 %v313, %v318
        %v321 = vmul.f32 %v314, %v318
        %v322 = vadd.f32 %v286, %v320
        %v323 = vadd.f32 %v287, %v321
        %v324 = vld [vmem:[%s1 + $0x10] sm:$0xff]
        %v325 = vld [vmem:[%s2 + $0x10] sm:$0xff]
        %v326 = vld [vmem:[%s3 + $0x10] sm:$0xff]
        %328 = vset.pattern.permute.xlu0 0
        %329 = vperm.xlu0 %328, %v324
        %v330 = vpop.permute.xlu0 %329
        %v332 = vmul.f32 %v330, %v242
        %v333 = vmul.f32 %v330, %v246
        %334 = vset.pattern.permute.xlu0 1
        %335 = vperm.xlu0 %334, %v324
        %v336 = vpop.permute.xlu0 %335
        %v338 = vmul.f32 %v336, %v259
        %v339 = vmul.f32 %v336, %v263
        %v340 = vadd.f32 %v332, %v338
        %v341 = vadd.f32 %v333, %v339
        %343 = vset.pattern.permute.xlu0 0
        %344 = vperm.xlu0 %343, %v325
        %v345 = vpop.permute.xlu0 %344
        %v347 = vadd.f32 %v340, %v345
        %v348 = vadd.f32 %v341, %v345
        %v349 = vmax.f32 %v347, 0.0
        %v350 = vmax.f32 %v348, 0.0
        %352 = vset.pattern.permute.xlu0 0
        %353 = vperm.xlu0 %352, %v326
        %v354 = vpop.permute.xlu0 %353
        %v356 = vmul.f32 %v349, %v354
        %v357 = vmul.f32 %v350, %v354
        %v358 = vadd.f32 %v322, %v356
        %v359 = vadd.f32 %v323, %v357
        %v360 = vld [vmem:[%s1 + $0x18] sm:$0xff]
        %v361 = vld [vmem:[%s2 + $0x18] sm:$0xff]
        %v362 = vld [vmem:[%s3 + $0x18] sm:$0xff]
        %364 = vset.pattern.permute.xlu0 0
        %365 = vperm.xlu0 %364, %v360
        %v366 = vpop.permute.xlu0 %365
        %v368 = vmul.f32 %v366, %v242
        %v369 = vmul.f32 %v366, %v246
        %370 = vset.pattern.permute.xlu0 1
        %371 = vperm.xlu0 %370, %v360
        %v372 = vpop.permute.xlu0 %371
        %v374 = vmul.f32 %v372, %v259
        %v375 = vmul.f32 %v372, %v263
        %v376 = vadd.f32 %v368, %v374
        %v377 = vadd.f32 %v369, %v375
        %379 = vset.pattern.permute.xlu0 0
        %380 = vperm.xlu0 %379, %v361
        %v381 = vpop.permute.xlu0 %380
        %v383 = vadd.f32 %v376, %v381
        %v384 = vadd.f32 %v377, %v381
        %v385 = vmax.f32 %v383, 0.0
        %v386 = vmax.f32 %v384, 0.0
        %388 = vset.pattern.permute.xlu0 0
        %389 = vperm.xlu0 %388, %v362
        %v390 = vpop.permute.xlu0 %389
        %v392 = vmul.f32 %v385, %v390
        %v393 = vmul.f32 %v386, %v390
        %v394 = vadd.f32 %v358, %v392
        %v395 = vadd.f32 %v359, %v393
        %v396 = vld [vmem:[%s1 + $0x20] sm:$0xff]
        %v397 = vld [vmem:[%s2 + $0x20] sm:$0xff]
        %v398 = vld [vmem:[%s3 + $0x20] sm:$0xff]
        %400 = vset.pattern.permute.xlu0 0
        %401 = vperm.xlu0 %400, %v396
        %v402 = vpop.permute.xlu0 %401
        %v404 = vmul.f32 %v402, %v242
        %v405 = vmul.f32 %v402, %v246
        %406 = vset.pattern.permute.xlu0 1
        %407 = vperm.xlu0 %406, %v396
        %v408 = vpop.permute.xlu0 %407
        %v410 = vmul.f32 %v408, %v259
        %v411 = vmul.f32 %v408, %v263
        %v412 = vadd.f32 %v404, %v410
        %v413 = vadd.f32 %v405, %v411
        %415 = vset.pattern.permute.xlu0 0
        %416 = vperm.xlu0 %415, %v397
        %v417 = vpop.permute.xlu0 %416
        %v419 = vadd.f32 %v412, %v417
        %v420 = vadd.f32 %v413, %v417
        %v421 = vmax.f32 %v419, 0.0
        %v422 = vmax.f32 %v420, 0.0
        %424 = vset.pattern.permute.xlu0 0
        %425 = vperm.xlu0 %424, %v398
        %v426 = vpop.permute.xlu0 %425
        %v428 = vmul.f32 %v421, %v426
        %v429 = vmul.f32 %v422, %v426
        %v430 = vadd.f32 %v394, %v428
        %v431 = vadd.f32 %v395, %v429
        %v432 = vld [vmem:[%s1 + $0x28] sm:$0xff]
        %v433 = vld [vmem:[%s2 + $0x28] sm:$0xff]
        %v434 = vld [vmem:[%s3 + $0x28] sm:$0xff]
        %436 = vset.pattern.permute.xlu0 0
        %437 = vperm.xlu0 %436, %v432
        %v438 = vpop.permute.xlu0 %437
        %v440 = vmul.f32 %v438, %v242
        %v441 = vmul.f32 %v438, %v246
        %442 = vset.pattern.permute.xlu0 1
        %443 = vperm.xlu0 %442, %v432
        %v444 = vpop.permute.xlu0 %443
        %v446 = vmul.f32 %v444, %v259
        %v447 = vmul.f32 %v444, %v263
        %v448 = vadd.f32 %v440, %v446
        %v449 = vadd.f32 %v441, %v447
        %451 = vset.pattern.permute.xlu0 0
        %452 = vperm.xlu0 %451, %v433
        %v453 = vpop.permute.xlu0 %452
        %v455 = vadd.f32 %v448, %v453
        %v456 = vadd.f32 %v449, %v453
        %v457 = vmax.f32 %v455, 0.0
        %v458 = vmax.f32 %v456, 0.0
        %460 = vset.pattern.permute.xlu0 0
        %461 = vperm.xlu0 %460, %v434
        %v462 = vpop.permute.xlu0 %461
        %v464 = vmul.f32 %v457, %v462
        %v465 = vmul.f32 %v458, %v462
        %v466 = vadd.f32 %v430, %v464
        %v467 = vadd.f32 %v431, %v465
        %v468 = vld [vmem:[%s1 + $0x30] sm:$0xff]
        %v469 = vld [vmem:[%s2 + $0x30] sm:$0xff]
        %v470 = vld [vmem:[%s3 + $0x30] sm:$0xff]
        %472 = vset.pattern.permute.xlu0 0
        %473 = vperm.xlu0 %472, %v468
        %v474 = vpop.permute.xlu0 %473
        %v476 = vmul.f32 %v474, %v242
        %v477 = vmul.f32 %v474, %v246
        %478 = vset.pattern.permute.xlu0 1
        %479 = vperm.xlu0 %478, %v468
        %v480 = vpop.permute.xlu0 %479
        %v482 = vmul.f32 %v480, %v259
        %v483 = vmul.f32 %v480, %v263
        %v484 = vadd.f32 %v476, %v482
        %v485 = vadd.f32 %v477, %v483
        %487 = vset.pattern.permute.xlu0 0
        %488 = vperm.xlu0 %487, %v469
        %v489 = vpop.permute.xlu0 %488
        %v491 = vadd.f32 %v484, %v489
        %v492 = vadd.f32 %v485, %v489
        %v493 = vmax.f32 %v491, 0.0
        %v494 = vmax.f32 %v492, 0.0
        %496 = vset.pattern.permute.xlu0 0
        %497 = vperm.xlu0 %496, %v470
        %v498 = vpop.permute.xlu0 %497
        %v500 = vmul.f32 %v493, %v498
        %v501 = vmul.f32 %v494, %v498
        %v502 = vadd.f32 %v466, %v500
        %v503 = vadd.f32 %v467, %v501
        %v504 = vrot.slane %v502, 4
        %v505 = vadd.f32 %v502, %v504
        %v506 = vrot.slane %v505, 2
        %v507 = vadd.f32 %v505, %v506
        %v508 = vrot.slane %v507, 1
        %v509 = vadd.f32 %v507, %v508
        %v510 = vrot.slane %v503, 4
        %v511 = vadd.f32 %v503, %v510
        %v512 = vrot.slane %v511, 2
        %v513 = vadd.f32 %v511, %v512
        %v514 = vrot.slane %v513, 1
        %v515 = vadd.f32 %v513, %v514
        %s516 = sld [smem:[#allocation2]]
        %v517 = vstv %s516
        %v518 = vadd.f32 %v509, %v517
        %v519 = vadd.f32 %v515, %v517
        %v520 = vsub.f32 0.0, %v518
        %v521 = vsub.f32 0.0, %v519
        %v522 = vmul.f32 %v520, 1.442695
        %v523 = vpow.pop %v522
        %v524 = vmul.f32 %v521, 1.442695
        %v525 = vpow.pop %v524
        %v526 = vadd.f32 %v523, 1.0
        %v527 = vadd.f32 %v525, 1.0
        %v528 = vrcp.pop %v526
        %v529 = vmul.f32 1.0, %v528
        %v530 = vrcp.pop %v527
        %v531 = vmul.f32 1.0, %v530
        %v534 = vcombine.low %v529, %v531
        %v536 = vunpack.c.l.s4 1966171168
        %v537 = vunpack.c.0.s8 %v536
        %v538 = vlaneseq
        %v539 = vshrl.u32 %v538, 7
        %v540 = vsub.s32 %v537, %v539
        %v541 = vrot.slane %v534, %v540
        %v543 = vunpack.c.l.s4 1966171168
        %v544 = vunpack.c.0.s8 %v543
        %v545 = vlaneseq
        %v546 = vshrl.u32 %v545, 7
        %v547 = vsub.s32 %v544, %v546
        %v548 = vrot.slane %v541, %v547
        %v550 = vlaneseq
        %vm551 = vcmp.ge.s32.totalorder %v550, 0
        %vm552 = vcmp.lt.s32.totalorder %v550, 256
        %vm553 = vmand %vm551, %vm552
        %554 = vst.msk [vmem:[%s219] sm:$0x3] %vm553, %v548
        %s555 = sand.u32 %s138, 1
        %s556 = scalar_lea.sflag [#allocation4], %s555
        %s557 = sand.u32 %s138, 1
        %s558 = smul.addr %s557, 2
        %s559 = scalar_lea.vmem [#allocation3], %s558
        // Predicated region
        $region41: #{tpu_custom_call.1} parent=39 // pred_check
          %p560 = pneg %p148
        $region42: #{tpu_custom_call.1} parent=39 // pred_check_branch
          %562 = sbr.rel (%p560) target = $region44
        $region43: #{tpu_custom_call.1} parent=39 // pred_region
          %s563 = smul.u32 2, %s20
          %s565 = ssub.s32 32, 32
          %566 = vsyncadd %s556, %s565
          %s567 = smul.addr %s563, 16
          %s568 = scalar_lea.hbm %s5, %s567
          %s570 = sshll.u32 %s559, 4
          %s571 = int_to_ptr.vmem [resolvable:$true] %s570
          %573 = dma.vmem_to_hbm [thread:$0]  %s571, 32, %s568, %s556
        $region44: #{tpu_custom_call.1} parent=39 // pred_fallthru
          _
      $region40: #{tpu_custom_call.1} parent=5 // pred_fallthru
        _
      %p574 = scmp.le.s32.totalorder 2, %s15
      // Predicated region
      $region45: #{tpu_custom_call.1} parent=5 // pred_check
        %p575 = pneg %p574
      $region46: #{tpu_custom_call.1} parent=5 // pred_check_branch
        %577 = sbr.rel (%p575) target = $region48
      $region47: #{tpu_custom_call.1} parent=5 // pred_region
        %s578 = ssub.s32 %s15, 2
        // Predicated region
        $region49: #{tpu_custom_call.1} parent=47 // pred_check
          %p579 = pneg %p154
        $region50: #{tpu_custom_call.1} parent=47 // pred_check_branch
          %581 = sbr.rel (%p579) target = $region52
        $region51: #{tpu_custom_call.1} parent=47 // pred_region
          %s582 = sand.u32 %s139, 1
          %s583 = scalar_lea.sflag [#allocation4], %s582
          %s584 = sand.u32 %s139, 1
          %s585 = smul.addr %s584, 2
          %s586 = scalar_lea.vmem [#allocation3], %s585
          %587 = dma.done %s583, 32
        $region52: #{tpu_custom_call.1} parent=47 // pred_fallthru
          _
      $region48: #{tpu_custom_call.1} parent=5 // pred_fallthru
        _
    $region6: #{tpu_custom_call.1} parent=1 // loop_footer
      %s19 = sadd.s32 1, %s15
    $region7: #{tpu_custom_call.1} parent=1 // loop_footer_branch
      %14 = sbr.rel target = $region3
    $region8: #{tpu_custom_call.1} parent=1 // loop_exit
      _
    %588 = vsyncpa [#allocation4], 1
    %s589 = scalar_lea.sflag [#allocation4], 1
    %590 = vsyncpa %s589, 1

</llo_original>
